<compile_context>
chip_gen: v6e
topology: v6e:2x2x1
jax: 0.10.0
libtpu: 0.0.40
codegen_flags: <defaults>
</compile_context>

<pallas_src>
import jax
import jax.numpy as jnp
from jax.experimental import pallas as pl
from jax.experimental.pallas import tpu as pltpu


def channel_attention_kernel(x_ref, w1_ref, w2_ref, w3_ref, b3_ref, o_ref):
    # x_ref block: (1, C, S); weights are small full arrays resident in VMEM.
    x = x_ref[0]                                             # (C, S), input dtype

    # Adaptive avg / max pool over the spatial (lane) axis, f32 accumulation,
    # without materializing a full f32 copy of the tile.
    s = x.shape[-1]
    avg = jnp.sum(x, axis=-1, keepdims=True,
                  dtype=jnp.float32) * jnp.float32(1.0 / s)  # (C, 1)
    mx = jnp.max(x, axis=-1, keepdims=True).astype(jnp.float32)  # (C, 1)
    pooled = jnp.concatenate([avg, mx], axis=1)              # (C, 2) - one fc pass for both

    w1 = w1_ref[...].astype(jnp.float32)                     # (hid, C)   = fc[0].weight
    w2 = w2_ref[...].astype(jnp.float32)                     # (inC, hid) = fc[2].weight
    w3 = w3_ref[...].astype(jnp.float32)                     # (C, inC)   = conv128_64.weight
    b3 = b3_ref[...].astype(jnp.float32)                     # (C, 1)     = conv128_64.bias

    # Shared fc on both pooled column vectors at once: 2 matmuls instead of 4.
    h = jnp.maximum(jnp.dot(w1, pooled,
                            preferred_element_type=jnp.float32), 0.0)   # (hid, 2)
    y = jnp.dot(w2, h, preferred_element_type=jnp.float32)              # (inC, 2)
    att = jax.nn.sigmoid(y[:, 0:1] + y[:, 1:2])                         # (inC, 1)

    # conv128_64: 1x1 conv in_channels -> 64 (with bias)
    gate = jnp.dot(w3, att, preferred_element_type=jnp.float32) + b3    # (C, 1)

    # Broadcast the per-channel gate across the lane (spatial) axis.
    o_ref[0] = (x * gate).astype(o_ref.dtype)                # (C, S)


def channel_attention(x_nchw, w1, w2, w3, b3):
    """x_nchw: (B, 64, H, W). Weights in PyTorch (out, in) orientation:
       w1 (hid, 64), w2 (in_ch, hid), w3 (64, in_ch), b3 (64, 1).
       Returns (B, 64, H, W)."""
    B, C, H, W = x_nchw.shape
    S = H * W
    hid = w1.shape[0]
    in_ch = w2.shape[0]

    # Free layout change: NCHW -> (B, C, S). No extra HBM read/write passes.
    x_bcs = x_nchw.reshape(B, C, S)

    # One (C, S) image slab per grid step; Pallas double-buffers in and out.
    block_bytes = C * S * x_nchw.dtype.itemsize
    assert 4 * block_bytes < 24 * 1024 * 1024, (
        "per-step VMEM footprint too large for the default scoped VMEM; "
        "tile S with a two-pass (pool, then apply-gate) scheme")
    # TODO(synk): add an S-tiled two-pass path (accumulate sum/max per batch,
    # then apply the gate) for very large H*W so blocks fit v7x's 64 MiB VMEM.

    out_bcs = pl.pallas_call(
        channel_attention_kernel,
        out_shape=jax.ShapeDtypeStruct((B, C, S), x_nchw.dtype),
        grid=(B,),
        in_specs=[
            pl.BlockSpec((1, C, S), lambda b: (b, 0, 0)),
            pl.BlockSpec((hid, C), lambda b: (0, 0)),
            pl.BlockSpec((in_ch, hid), lambda b: (0, 0)),
            pl.BlockSpec((C, in_ch), lambda b: (0, 0)),
            pl.BlockSpec((C, 1), lambda b: (0, 0)),
        ],
        out_specs=pl.BlockSpec((1, C, S), lambda b: (b, 0, 0)),
        compiler_params=pltpu.CompilerParams(
            dimension_semantics=("parallel",)),
    )(x_bcs, w1, w2, w3, b3)

    return out_bcs.reshape(B, C, H, W)


def reference(x, w1, w2, w3, b3):
    avg = x.mean(axis=(2, 3))                       # (B, C)
    mx = x.max(axis=(2, 3))                         # (B, C)

    def fc(p):
        return jnp.maximum(p @ w1.T, 0.0) @ w2.T

    att = jax.nn.sigmoid(fc(avg) + fc(mx))          # (B, in_ch)
    gate = att @ w3.T + b3[:, 0]                    # (B, C)
    return gate[:, :, None, None] * x


if __name__ == "__main__":
    # Module config: in_channels=128, ratio=16 (hidden = 8); x has 64 channels
    # (the fc's first 1x1 conv hard-codes 64 input channels).
    in_channels = 128
    ratio = 16
    hidden = in_channels // ratio        # 8
    C = 64
    B, H, W = 2, 16, 16

    key = jax.random.PRNGKey(0)
    kx, k1, k2, k3, kb = jax.random.split(key, 5)

    x = jax.random.normal(kx, (B, C, H, W), dtype=jnp.float32)

    # Deterministic synthetic parameters, stored in PyTorch (out, in) layout.
    w1 = jax.random.normal(k1, (hidden, C), dtype=jnp.float32) * 0.1         # fc[0]: 64 -> hidden
    w2 = jax.random.normal(k2, (in_channels, hidden), dtype=jnp.float32) * 0.1  # fc[2]: hidden -> in_channels
    w3 = jax.random.normal(k3, (C, in_channels), dtype=jnp.float32) * 0.1     # conv128_64: in_channels -> 64
    b3 = jax.random.normal(kb, (C, 1), dtype=jnp.float32) * 0.1               # conv128_64 bias

    out = channel_attention(x, w1, w2, w3, b3)
    out = jax.block_until_ready(out)

    ref = reference(x, w1, w2, w3, b3)
    assert out.shape == (B, C, H, W)
    assert jnp.allclose(out, ref, atol=1e-4, rtol=1e-4), "mismatch vs reference"

    print("KERNEL_OK")
</pallas_src>

<mosaic_0001>
module attributes {stable_mosaic.version = 11 : i64} {
  func.func @channel_attention_kernel(%arg0: i32, %arg1: memref<1x64x256xf32, #tpu.memory_space<vmem>>, %arg2: memref<8x64xf32, #tpu.memory_space<vmem>>, %arg3: memref<128x8xf32, #tpu.memory_space<vmem>>, %arg4: memref<64x128xf32, #tpu.memory_space<vmem>>, %arg5: memref<64x1xf32, #tpu.memory_space<vmem>>, %arg6: memref<1x64x256xf32, #tpu.memory_space<vmem>>) attributes {dimension_semantics = [#tpu.dimension_semantics<parallel>], iteration_bounds = array<i64: 2>, scalar_prefetch = 0 : i64, scratch_operands = 0 : i64, tpu.core_type = #tpu.core_type<tc>, window_params = [{transform_indices = @transform_0, window_bounds = array<i64: 1, 64, 256>}, {pipeline_mode = #tpu.pipeline_mode<synchronous>, transform_indices = @transform_1, window_bounds = array<i64: 8, 64>}, {pipeline_mode = #tpu.pipeline_mode<synchronous>, transform_indices = @transform_2, window_bounds = array<i64: 128, 8>}, {pipeline_mode = #tpu.pipeline_mode<synchronous>, transform_indices = @transform_3, window_bounds = array<i64: 64, 128>}, {pipeline_mode = #tpu.pipeline_mode<synchronous>, transform_indices = @transform_4, window_bounds = array<i64: 64, 1>}, {transform_indices = @transform_5, window_bounds = array<i64: 1, 64, 256>}]} {
    %c0 = arith.constant 0 : index
    %c0_0 = arith.constant 0 : index
    %c0_1 = arith.constant 0 : index
    %0 = vector.load %arg1[%c0, %c0_0, %c0_1] : memref<1x64x256xf32, #tpu.memory_space<vmem>>, vector<1x64x256xf32>
    %1 = vector.shape_cast %0 : vector<1x64x256xf32> to vector<64x256xf32>
    %cst = arith.constant dense<0.000000e+00> : vector<64xf32>
    %2 = vector.multi_reduction <add>, %1, %cst [1] : vector<64x256xf32> to vector<64xf32>
    %3 = vector.shape_cast %2 : vector<64xf32> to vector<64x1xf32>
    %cst_2 = arith.constant 3.906250e-03 : f32
    %4 = vector.broadcast %cst_2 : f32 to vector<64x1xf32>
    %5 = arith.mulf %3, %4 : vector<64x1xf32>
    %cst_3 = arith.constant dense<0xFF800000> : vector<64xf32>
    %6 = vector.multi_reduction <maximumf>, %1, %cst_3 [1] : vector<64x256xf32> to vector<64xf32>
    %7 = vector.shape_cast %6 : vector<64xf32> to vector<64x1xf32>
    %8 = tpu.concatenate %5, %7 in 1 : vector<64x1xf32>, vector<64x1xf32> -> vector<64x2xf32>
    %c0_4 = arith.constant 0 : index
    %c0_5 = arith.constant 0 : index
    %9 = vector.load %arg2[%c0_4, %c0_5] : memref<8x64xf32, #tpu.memory_space<vmem>>, vector<8x64xf32>
    %c0_6 = arith.constant 0 : index
    %c0_7 = arith.constant 0 : index
    %10 = vector.load %arg3[%c0_6, %c0_7] : memref<128x8xf32, #tpu.memory_space<vmem>>, vector<128x8xf32>
    %c0_8 = arith.constant 0 : index
    %c0_9 = arith.constant 0 : index
    %11 = vector.load %arg4[%c0_8, %c0_9] : memref<64x128xf32, #tpu.memory_space<vmem>>, vector<64x128xf32>
    %c0_10 = arith.constant 0 : index
    %c0_11 = arith.constant 0 : index
    %12 = vector.load %arg5[%c0_10, %c0_11] : memref<64x1xf32, #tpu.memory_space<vmem>>, vector<64x1xf32>
    %cst_12 = arith.constant dense<0.000000e+00> : vector<8x2xf32>
    %13 = tpu.matmul %9, %8, %cst_12 {dimension_numbers = #tpu.dot_dimension_numbers<[1], [0], [0], [1], [0, 0, 1, 1], [], []>} : vector<8x64xf32>, vector<64x2xf32>, vector<8x2xf32> -> vector<8x2xf32>
    %cst_13 = arith.constant 0.000000e+00 : f32
    %14 = vector.broadcast %cst_13 : f32 to vector<8x2xf32>
    %15 = arith.maximumf %13, %14 : vector<8x2xf32>
    %cst_14 = arith.constant dense<0.000000e+00> : vector<128x2xf32>
    %16 = tpu.matmul %10, %15, %cst_14 {dimension_numbers = #tpu.dot_dimension_numbers<[1], [0], [0], [1], [0, 0, 1, 1], [], []>} : vector<128x8xf32>, vector<8x2xf32>, vector<128x2xf32> -> vector<128x2xf32>
    %17 = vector.extract_strided_slice %16 {offsets = [0, 0], sizes = [128, 1], strides = [1, 1]} : vector<128x2xf32> to vector<128x1xf32>
    %18 = vector.extract_strided_slice %16 {offsets = [0, 1], sizes = [128, 1], strides = [1, 1]} : vector<128x2xf32> to vector<128x1xf32>
    %19 = arith.addf %17, %18 : vector<128x1xf32>
    %20 = arith.negf %19 : vector<128x1xf32>
    %21 = math.exp %20 : vector<128x1xf32>
    %cst_15 = arith.constant 1.000000e+00 : f32
    %22 = vector.broadcast %cst_15 : f32 to vector<128x1xf32>
    %23 = arith.addf %22, %21 : vector<128x1xf32>
    %24 = arith.divf %22, %23 : vector<128x1xf32>
    %cst_16 = arith.constant dense<0.000000e+00> : vector<64x1xf32>
    %25 = tpu.matmul %11, %24, %cst_16 {dimension_numbers = #tpu.dot_dimension_numbers<[1], [0], [0], [1], [0, 0, 1, 1], [], []>} : vector<64x128xf32>, vector<128x1xf32>, vector<64x1xf32> -> vector<64x1xf32>
    %26 = arith.addf %25, %12 : vector<64x1xf32>
    %27 = vector.broadcast %26 : vector<64x1xf32> to vector<64x256xf32>
    %28 = arith.mulf %1, %27 : vector<64x256xf32>
    %c0_17 = arith.constant 0 : index
    %c0_18 = arith.constant 0 : index
    %c0_19 = arith.constant 0 : index
    %29 = vector.load %arg6[%c0_17, %c0_18, %c0_19] : memref<1x64x256xf32, #tpu.memory_space<vmem>>, vector<1x64x256xf32>
    %30 = vector.shape_cast %29 : vector<1x64x256xf32> to vector<64x256xf32>
    %31 = vector.shape_cast %28 : vector<64x256xf32> to vector<1x64x256xf32>
    tpu.vector_store %arg6[%c0_17, %c0_18, %c0_19], %31 {strides = array<i32>} : memref<1x64x256xf32, #tpu.memory_space<vmem>>, vector<1x64x256xf32>,
    return
  }
  func.func @transform_0(%arg0: i32) -> (i32, i32, i32) {
    %c0_i32 = arith.constant 0 : i32
    %c0_i32_0 = arith.constant 0 : i32
    %c0_i32_1 = arith.constant 0 : i32
    return %arg0, %c0_i32, %c0_i32_0 : i32, i32, i32
  }
  func.func @transform_1(%arg0: i32) -> (i32, i32) {
    %c0_i32 = arith.constant 0 : i32
    %c0_i32_0 = arith.constant 0 : i32
    %c0_i32_1 = arith.constant 0 : i32
    return %c0_i32, %c0_i32_0 : i32, i32
  }
  func.func @transform_2(%arg0: i32) -> (i32, i32) {
    %c0_i32 = arith.constant 0 : i32
    %c0_i32_0 = arith.constant 0 : i32
    %c0_i32_1 = arith.constant 0 : i32
    return %c0_i32, %c0_i32_0 : i32, i32
  }
  func.func @transform_3(%arg0: i32) -> (i32, i32) {
    %c0_i32 = arith.constant 0 : i32
    %c0_i32_0 = arith.constant 0 : i32
    %c0_i32_1 = arith.constant 0 : i32
    return %c0_i32, %c0_i32_0 : i32, i32
  }
  func.func @transform_4(%arg0: i32) -> (i32, i32) {
    %c0_i32 = arith.constant 0 : i32
    %c0_i32_0 = arith.constant 0 : i32
    %c0_i32_1 = arith.constant 0 : i32
    return %c0_i32, %c0_i32_0 : i32, i32
  }
  func.func @transform_5(%arg0: i32) -> (i32, i32, i32) {
    %c0_i32 = arith.constant 0 : i32
    %c0_i32_0 = arith.constant 0 : i32
    %c0_i32_1 = arith.constant 0 : i32
    return %arg0, %c0_i32, %c0_i32_0 : i32, i32, i32
  }
}

</mosaic_0001>

<llo_original>
// kernel: tpu_custom_call.1
$region0: #{tpu_custom_call.1}
  #allocation0 [shape = 'u32[]', space=smem, size = 0x4, offset = 0x4, fixed_abs, tag = 'smem constant byte address 0x4 - core index']
  #allocation1 [shape = 'u32[144,128]{1,0:T(1,128)}', space=vmem, size = 0x12000, scoped, tag = 'internal scratch']
  %s0 = inlined_call_operand.hbm [shape: f32[2,64,256], index: 0, kind: input, shape index: {}]
  %s1 = inlined_call_operand.vmem [shape: f32[8,64], index: 1, kind: input, shape index: {}]
  %s2 = inlined_call_operand.vmem [shape: f32[128,8], index: 2, kind: input, shape index: {}]
  %s3 = inlined_call_operand.vmem [shape: f32[64,128], index: 3, kind: input, shape index: {}]
  %s4 = inlined_call_operand.vmem [shape: f32[64,1], index: 4, kind: input, shape index: {}]
  %s5 = inlined_call_operand.hbm [shape: f32[2,64,256], index: 5, kind: output, shape index: {}]
  %s6 = sld [smem:[#allocation0]]
  $region57: #{tpu_custom_call.1} parent=0
    _
  %s8 = ssub.s32 1, %s6
  %s9 = scalar_select 0, %s8, %s6
  $region1: #{tpu_custom_call.1} parent=0
    #allocation2 [shape = 'u8[131072]{0}', space=vmem, size = 0x20000, scoped, tag = 'input window, operand 0']
    #allocation3 [shape = 's32[2]{0}', space=sflag, size = 0x8, scoped, tag = 'scoped memory for tpu_custom_call.1']
    #allocation4 [shape = 's32[2]{0}', space=sflag, size = 0x8, scoped, tag = 'scoped memory for tpu_custom_call.1']
    #allocation5 [shape = 'u8[131072]{0}', space=vmem, size = 0x20000, scoped, tag = 'output window, operand 0']
    %10 = vsyncpa [#allocation3], 0
    %s11 = scalar_lea.sflag [#allocation3], 1
    %12 = vsyncpa %s11, 0
    %13 = vsyncpa [#allocation4], 0
    %s14 = scalar_lea.sflag [#allocation4], 1
    %15 = vsyncpa %s14, 0
    loop: start=0, step=1, limit=4
    $region2: #{tpu_custom_call.1} parent=1 // loop_pre_header
      _
    $region3: #{tpu_custom_call.1} parent=1 // loop_header
      %s17 = sphi 0, %s21
      %p18 = scmp.ge.s32.totalorder %s17, 4
      %s27 = sphi 0, %s29
      %s30 = sphi 0, %s27
      %s31 = sphi 0, %s30
      %s47 = sphi 0, %s31
      %s51 = sphi 0, %s51
      %s53 = sphi 0, %s51
      %s54 = sphi 0, %s53
      %s68 = sphi 0, %s54
      %s72 = sphi 0, %s72
      %s74 = sphi 0, %s72
      %s75 = sphi 0, %s74
      %s89 = sphi 0, %s75
      %s93 = sphi 0, %s93
      %s95 = sphi 0, %s93
      %s96 = sphi 0, %s95
      %s110 = sphi 0, %s96
      %s114 = sphi 0, %s114
      %s116 = sphi 0, %s114
      %s117 = sphi 0, %s116
      %s131 = sphi 0, %s117
      %s137 = sphi 0, %s139
      %s140 = sphi 0, %s137
      %s141 = sphi 0, %s140
      %s157 = sphi 0, %s141
    $region4: #{tpu_custom_call.1} parent=1 // loop_header_branch
      %20 = sbr.rel (%p18) target = $region8
    $region5: #{tpu_custom_call.1} parent=1 // loop_body
      %s22 = ssub.s32 %s17, 1
      %s23 = ssub.s32 %s17, 2
      %s24 = sadd.s32 %s17, 1
      %s25 = ssub.s32 %s17, %s24
      %p26 = scmp.eq.s32.totalorder %s25, 0
      %s28 = sadd.s32 %s27, 1
      %s29 = scalar_select %p26, %s27, %s28
      %p32 = pneg %p26
      %p33 = scmp.eq.s32.totalorder %s17, 1
      %p34 = por %p32, %p33
      %p35 = scmp.ne.s32.totalorder %s27, %s30
      %p36 = scmp.eq.s32.totalorder %s17, 0
      %p37 = por %p35, %p36
      %p38 = scmp.ne.s32.totalorder %s27, %s30
      %p39 = scmp.eq.s32.totalorder %s22, 1
      %p40 = por %p38, %p39
      %p41 = scmp.ne.s32.totalorder %s30, %s31
      %p42 = scmp.eq.s32.totalorder %s22, 0
      %p43 = por %p41, %p42
      %p44 = scmp.ne.s32.totalorder %s30, %s31
      %p45 = scmp.eq.s32.totalorder %s23, 1
      %p46 = por %p44, %p45
      %p48 = scmp.ne.s32.totalorder %s31, %s47
      %p49 = scmp.eq.s32.totalorder %s23, 0
      %p50 = por %p48, %p49
      %s52 = sadd.s32 %s51, 1
      %p55 = scmp.eq.s32.totalorder %s17, 1
      %p56 = scmp.ne.s32.totalorder %s51, %s53
      %p57 = scmp.eq.s32.totalorder %s17, 0
      %p58 = por %p56, %p57
      %p59 = scmp.ne.s32.totalorder %s51, %s53
      %p60 = scmp.eq.s32.totalorder %s22, 1
      %p61 = por %p59, %p60
      %p62 = scmp.ne.s32.totalorder %s53, %s54
      %p63 = scmp.eq.s32.totalorder %s22, 0
      %p64 = por %p62, %p63
      %p65 = scmp.ne.s32.totalorder %s53, %s54
      %p66 = scmp.eq.s32.totalorder %s23, 1
      %p67 = por %p65, %p66
      %p69 = scmp.ne.s32.totalorder %s54, %s68
      %p70 = scmp.eq.s32.totalorder %s23, 0
      %p71 = por %p69, %p70
      %s73 = sadd.s32 %s72, 1
      %p76 = scmp.eq.s32.totalorder %s17, 1
      %p77 = scmp.ne.s32.totalorder %s72, %s74
      %p78 = scmp.eq.s32.totalorder %s17, 0
      %p79 = por %p77, %p78
      %p80 = scmp.ne.s32.totalorder %s72, %s74
      %p81 = scmp.eq.s32.totalorder %s22, 1
      %p82 = por %p80, %p81
      %p83 = scmp.ne.s32.totalorder %s74, %s75
      %p84 = scmp.eq.s32.totalorder %s22, 0
      %p85 = por %p83, %p84
      %p86 = scmp.ne.s32.totalorder %s74, %s75
      %p87 = scmp.eq.s32.totalorder %s23, 1
      %p88 = por %p86, %p87
      %p90 = scmp.ne.s32.totalorder %s75, %s89
      %p91 = scmp.eq.s32.totalorder %s23, 0
      %p92 = por %p90, %p91
      %s94 = sadd.s32 %s93, 1
      %p97 = scmp.eq.s32.totalorder %s17, 1
      %p98 = scmp.ne.s32.totalorder %s93, %s95
      %p99 = scmp.eq.s32.totalorder %s17, 0
      %p100 = por %p98, %p99
      %p101 = scmp.ne.s32.totalorder %s93, %s95
      %p102 = scmp.eq.s32.totalorder %s22, 1
      %p103 = por %p101, %p102
      %p104 = scmp.ne.s32.totalorder %s95, %s96
      %p105 = scmp.eq.s32.totalorder %s22, 0
      %p106 = por %p104, %p105
      %p107 = scmp.ne.s32.totalorder %s95, %s96
      %p108 = scmp.eq.s32.totalorder %s23, 1
      %p109 = por %p107, %p108
      %p111 = scmp.ne.s32.totalorder %s96, %s110
      %p112 = scmp.eq.s32.totalorder %s23, 0
      %p113 = por %p111, %p112
      %s115 = sadd.s32 %s114, 1
      %p118 = scmp.eq.s32.totalorder %s17, 1
      %p119 = scmp.ne.s32.totalorder %s114, %s116
      %p120 = scmp.eq.s32.totalorder %s17, 0
      %p121 = por %p119, %p120
      %p122 = scmp.ne.s32.totalorder %s114, %s116
      %p123 = scmp.eq.s32.totalorder %s22, 1
      %p124 = por %p122, %p123
      %p125 = scmp.ne.s32.totalorder %s116, %s117
      %p126 = scmp.eq.s32.totalorder %s22, 0
      %p127 = por %p125, %p126
      %p128 = scmp.ne.s32.totalorder %s116, %s117
      %p129 = scmp.eq.s32.totalorder %s23, 1
      %p130 = por %p128, %p129
      %p132 = scmp.ne.s32.totalorder %s117, %s131
      %p133 = scmp.eq.s32.totalorder %s23, 0
      %p134 = por %p132, %p133
      %s135 = ssub.s32 %s17, %s24
      %p136 = scmp.eq.s32.totalorder %s135, 0
      %s138 = sadd.s32 %s137, 1
      %s139 = scalar_select %p136, %s137, %s138
      %p142 = pneg %p136
      %p143 = scmp.eq.s32.totalorder %s17, 1
      %p144 = por %p142, %p143
      %p145 = scmp.ne.s32.totalorder %s137, %s140
      %p146 = scmp.eq.s32.totalorder %s17, 0
      %p147 = por %p145, %p146
      %p148 = scmp.ne.s32.totalorder %s137, %s140
      %p149 = scmp.eq.s32.totalorder %s22, 1
      %p150 = por %p148, %p149
      %p151 = scmp.ne.s32.totalorder %s140, %s141
      %p152 = scmp.eq.s32.totalorder %s22, 0
      %p153 = por %p151, %p152
      %p154 = scmp.ne.s32.totalorder %s140, %s141
      %p155 = scmp.eq.s32.totalorder %s23, 1
      %p156 = por %p154, %p155
      %p158 = scmp.ne.s32.totalorder %s141, %s157
      %p159 = scmp.eq.s32.totalorder %s23, 0
      %p160 = por %p158, %p159
      %p161 = scmp.le.s32.totalorder 1, %s17
      %p162 = scmp.lt.s32.totalorder %s17, 3
      %p163 = pnand %p161, %p162
      %p164 = pneg %p163
      // Predicated region
      $region9: #{tpu_custom_call.1} parent=5 // pred_check
        _
      $region10: #{tpu_custom_call.1} parent=5 // pred_check_branch
        %166 = sbr.rel (%p163) target = $region12
      $region11: #{tpu_custom_call.1} parent=5 // pred_region
        %s167 = ssub.s32 %s17, 1
        // Predicated region
        $region13: #{tpu_custom_call.1} parent=11 // pred_check
          %p168 = pneg %p64
        $region14: #{tpu_custom_call.1} parent=11 // pred_check_branch
          %170 = sbr.rel (%p168) target = $region16
        $region15: #{tpu_custom_call.1} parent=11 // pred_region
          _
        $region16: #{tpu_custom_call.1} parent=11 // pred_fallthru
          _
        // Predicated region
        $region17: #{tpu_custom_call.1} parent=11 // pred_check
          %p171 = pneg %p85
        $region18: #{tpu_custom_call.1} parent=11 // pred_check_branch
          %173 = sbr.rel (%p171) target = $region20
        $region19: #{tpu_custom_call.1} parent=11 // pred_region
          _
        $region20: #{tpu_custom_call.1} parent=11 // pred_fallthru
          _
        // Predicated region
        $region21: #{tpu_custom_call.1} parent=11 // pred_check
          %p174 = pneg %p106
        $region22: #{tpu_custom_call.1} parent=11 // pred_check_branch
          %176 = sbr.rel (%p174) target = $region24
        $region23: #{tpu_custom_call.1} parent=11 // pred_region
          _
        $region24: #{tpu_custom_call.1} parent=11 // pred_fallthru
          _
        // Predicated region
        $region25: #{tpu_custom_call.1} parent=11 // pred_check
          %p177 = pneg %p127
        $region26: #{tpu_custom_call.1} parent=11 // pred_check_branch
          %179 = sbr.rel (%p177) target = $region28
        $region27: #{tpu_custom_call.1} parent=11 // pred_region
          _
        $region28: #{tpu_custom_call.1} parent=11 // pred_fallthru
          _
      $region12: #{tpu_custom_call.1} parent=5 // pred_fallthru
        _
      %p180 = scmp.lt.s32.totalorder %s17, 2
      // Predicated region
      $region29: #{tpu_custom_call.1} parent=5 // pred_check
        %p181 = pneg %p180
      $region30: #{tpu_custom_call.1} parent=5 // pred_check_branch
        %183 = sbr.rel (%p181) target = $region32
      $region31: #{tpu_custom_call.1} parent=5 // pred_region
        // Predicated region
        $region33: #{tpu_custom_call.1} parent=31 // pred_check
          %p184 = pneg %p37
        $region34: #{tpu_custom_call.1} parent=31 // pred_check_branch
          %186 = sbr.rel (%p184) target = $region36
        $region35: #{tpu_custom_call.1} parent=31 // pred_region
          %s187 = sand.u32 %s27, 1
          %s188 = scalar_lea.sflag [#allocation3], %s187
          %s189 = sand.u32 %s27, 1
          %s190 = smul.addr %s189, 128
          %s191 = scalar_lea.vmem [#allocation2], %s190
          %s193 = ssub.s32 2048, 2048
          %194 = vsyncadd %s188, %s193
          %s195 = smul.addr %s17, 16
          %s196 = smul.addr %s195, 128
          %s197 = scalar_lea.hbm %s0, %s196
          %s198 = sshll.u32 %s191, 4
          %s199 = int_to_ptr.vmem [resolvable:$true] %s198
          %204 = dma.hbm_to_vmem [thread:$0]  %s197, 2048, %s199, %s188, 256, 256, 16
        $region36: #{tpu_custom_call.1} parent=31 // pred_fallthru
          _
      $region32: #{tpu_custom_call.1} parent=5 // pred_fallthru
        _
      %p205 = scmp.le.s32.totalorder 1, %s17
      %p206 = scmp.lt.s32.totalorder %s17, 3
      %p207 = pnand %p205, %p206
      %p208 = pneg %p207
      // Predicated region
      $region37: #{tpu_custom_call.1} parent=5 // pred_check
        _
      $region38: #{tpu_custom_call.1} parent=5 // pred_check_branch
        %210 = sbr.rel (%p207) target = $region40
      $region39: #{tpu_custom_call.1} parent=5 // pred_region
        %s211 = ssub.s32 %s17, 1
        %s212 = sand.u32 %s30, 1
        %s213 = scalar_lea.sflag [#allocation3], %s212
        %s214 = sand.u32 %s30, 1
        %s215 = smul.addr %s214, 128
        %s216 = scalar_lea.vmem [#allocation2], %s215
        // Predicated region
        $region41: #{tpu_custom_call.1} parent=39 // pred_check
          %p217 = pneg %p43
        $region42: #{tpu_custom_call.1} parent=39 // pred_check_branch
          %219 = sbr.rel (%p217) target = $region44
        $region43: #{tpu_custom_call.1} parent=39 // pred_region
          %220 = dma.done %s213, 2048
        $region44: #{tpu_custom_call.1} parent=39 // pred_fallthru
          _
        %s221 = sand.u32 %s30, 1
        %s222 = scalar_lea.sflag [#allocation3], %s221
        %s223 = sand.u32 %s30, 1
        %s224 = smul.addr %s223, 128
        %s225 = scalar_lea.vmem [#allocation2], %s224
        %p226 = pneg %p43
        %p227 = pneg %p40
        %p228 = pneg %p64
        %p229 = pneg %p61
        %p230 = pneg %p85
        %p231 = pneg %p82
        %p232 = pneg %p106
        %p233 = pneg %p103
        %p234 = pneg %p127
        %p235 = pneg %p124
        %p236 = pneg %p153
        %p237 = pneg %p150
        %s238 = sand.u32 %s140, 1
        %s239 = scalar_lea.sflag [#allocation4], %s238
        %s240 = sand.u32 %s140, 1
        %s241 = smul.addr %s240, 128
        %s242 = scalar_lea.vmem [#allocation5], %s241
        %v243 = vld [vmem:[%s216] sm:$0xff]
        %v244 = vld [vmem:[%s216 + $0x8] sm:$0xff]
        %v245 = vld [vmem:[%s216 + $0x10] sm:$0xff]
        %v246 = vld [vmem:[%s216 + $0x18] sm:$0xff]
        %v247 = vld [vmem:[%s216 + $0x20] sm:$0xff]
        %v248 = vld [vmem:[%s216 + $0x28] sm:$0xff]
        %v249 = vld [vmem:[%s216 + $0x30] sm:$0xff]
        %v250 = vld [vmem:[%s216 + $0x38] sm:$0xff]
        %v251 = vld [vmem:[%s216 + $0x40] sm:$0xff]
        %v252 = vld [vmem:[%s216 + $0x48] sm:$0xff]
        %v253 = vld [vmem:[%s216 + $0x50] sm:$0xff]
        %v254 = vld [vmem:[%s216 + $0x58] sm:$0xff]
        %v255 = vld [vmem:[%s216 + $0x60] sm:$0xff]
        %v256 = vld [vmem:[%s216 + $0x68] sm:$0xff]
        %v257 = vld [vmem:[%s216 + $0x70] sm:$0xff]
        %v258 = vld [vmem:[%s216 + $0x78] sm:$0xff]
        %v259 = vadd.f32 %v243, %v244
        %260 = vadd.xlane.f32.xlu0 %v259
        %v261 = vpop.xlane.xlu0 %260
        %v262 = vadd.f32 %v245, %v246
        %263 = vadd.xlane.f32.xlu0 %v262
        %v264 = vpop.xlane.xlu0 %263
        %v265 = vadd.f32 %v247, %v248
        %266 = vadd.xlane.f32.xlu0 %v265
        %v267 = vpop.xlane.xlu0 %266
        %v268 = vadd.f32 %v249, %v250
        %269 = vadd.xlane.f32.xlu0 %v268
        %v270 = vpop.xlane.xlu0 %269
        %v271 = vadd.f32 %v251, %v252
        %272 = vadd.xlane.f32.xlu0 %v271
        %v273 = vpop.xlane.xlu0 %272
        %v274 = vadd.f32 %v253, %v254
        %275 = vadd.xlane.f32.xlu0 %v274
        %v276 = vpop.xlane.xlu0 %275
        %v277 = vadd.f32 %v255, %v256
        %278 = vadd.xlane.f32.xlu0 %v277
        %v279 = vpop.xlane.xlu0 %278
        %v280 = vadd.f32 %v257, %v258
        %281 = vadd.xlane.f32.xlu0 %v280
        %v282 = vpop.xlane.xlu0 %281
        %v283 = vmul.f32 %v261, 0.00390625
        %v284 = vmul.f32 %v264, 0.00390625
        %v285 = vmul.f32 %v267, 0.00390625
        %v286 = vmul.f32 %v270, 0.00390625
        %v287 = vmul.f32 %v273, 0.00390625
        %v288 = vmul.f32 %v276, 0.00390625
        %v289 = vmul.f32 %v279, 0.00390625
        %v290 = vmul.f32 %v282, 0.00390625
        %v291 = vmax.f32 %v243, %v244
        %292 = vmax.xlane.f32.xlu0 %v291
        %v293 = vpop.xlane.xlu0 %292
        %v294 = vmax.f32 %v245, %v246
        %295 = vmax.xlane.f32.xlu0 %v294
        %v296 = vpop.xlane.xlu0 %295
        %v297 = vmax.f32 %v247, %v248
        %298 = vmax.xlane.f32.xlu0 %v297
        %v299 = vpop.xlane.xlu0 %298
        %v300 = vmax.f32 %v249, %v250
        %301 = vmax.xlane.f32.xlu0 %v300
        %v302 = vpop.xlane.xlu0 %301
        %v303 = vmax.f32 %v251, %v252
        %304 = vmax.xlane.f32.xlu0 %v303
        %v305 = vpop.xlane.xlu0 %304
        %v306 = vmax.f32 %v253, %v254
        %307 = vmax.xlane.f32.xlu0 %v306
        %v308 = vpop.xlane.xlu0 %307
        %v309 = vmax.f32 %v255, %v256
        %310 = vmax.xlane.f32.xlu0 %v309
        %v311 = vpop.xlane.xlu0 %310
        %v312 = vmax.f32 %v257, %v258
        %313 = vmax.xlane.f32.xlu0 %v312
        %v314 = vpop.xlane.xlu0 %313
        %vm315 = vcmask 7168
        %v316 = vsel %vm315, %v283, %v293
        %v317 = vsel %vm315, %v284, %v296
        %v318 = vsel %vm315, %v285, %v299
        %v319 = vsel %vm315, %v286, %v302
        %v320 = vsel %vm315, %v287, %v305
        %v321 = vsel %vm315, %v288, %v308
        %v322 = vsel %vm315, %v289, %v311
        %v323 = vsel %vm315, %v290, %v314
        %v324 = vld [vmem:[%s1] sm:$0xff]
        %v325 = vld [vmem:[%s2] sm:$0xff]
        %v326 = vld [vmem:[%s2 + $0x8] sm:$0xff]
        %v327 = vld [vmem:[%s2 + $0x10] sm:$0xff]
        %v328 = vld [vmem:[%s2 + $0x18] sm:$0xff]
        %v329 = vld [vmem:[%s2 + $0x20] sm:$0xff]
        %v330 = vld [vmem:[%s2 + $0x28] sm:$0xff]
        %v331 = vld [vmem:[%s2 + $0x30] sm:$0xff]
        %v332 = vld [vmem:[%s2 + $0x38] sm:$0xff]
        %v333 = vld [vmem:[%s2 + $0x40] sm:$0xff]
        %v334 = vld [vmem:[%s2 + $0x48] sm:$0xff]
        %v335 = vld [vmem:[%s2 + $0x50] sm:$0xff]
        %v336 = vld [vmem:[%s2 + $0x58] sm:$0xff]
        %v337 = vld [vmem:[%s2 + $0x60] sm:$0xff]
        %v338 = vld [vmem:[%s2 + $0x68] sm:$0xff]
        %v339 = vld [vmem:[%s2 + $0x70] sm:$0xff]
        %v340 = vld [vmem:[%s2 + $0x78] sm:$0xff]
        %v341 = vld [vmem:[%s3] sm:$0xff]
        %v342 = vld [vmem:[%s3 + $0x8] sm:$0xff]
        %v343 = vld [vmem:[%s3 + $0x10] sm:$0xff]
        %v344 = vld [vmem:[%s3 + $0x18] sm:$0xff]
        %v345 = vld [vmem:[%s3 + $0x20] sm:$0xff]
        %v346 = vld [vmem:[%s3 + $0x28] sm:$0xff]
        %v347 = vld [vmem:[%s3 + $0x30] sm:$0xff]
        %v348 = vld [vmem:[%s3 + $0x38] sm:$0xff]
        %v349 = vld [vmem:[%s4] sm:$0xff]
        %v350 = vld [vmem:[%s4 + $0x8] sm:$0xff]
        %v351 = vld [vmem:[%s4 + $0x10] sm:$0xff]
        %v352 = vld [vmem:[%s4 + $0x18] sm:$0xff]
        %v353 = vld [vmem:[%s4 + $0x20] sm:$0xff]
        %v354 = vld [vmem:[%s4 + $0x28] sm:$0xff]
        %v355 = vld [vmem:[%s4 + $0x30] sm:$0xff]
        %v356 = vld [vmem:[%s4 + $0x38] sm:$0xff]
        %vm357 = vcmask 523264
        %v359 = vsel %vm357, %v324, 0
        %361 = vmatprep.subr.mxu0 0.0
        %362 = vmatpush1.msra.mxu0 0.0
        %363 = vmatprep.subr.mxu0 0.0
        %364 = vmatpush1.msra.mxu0 0.0
        %365 = vmatprep.subr.mxu0 0.0
        %366 = vmatpush1.msra.mxu0 0.0
        %367 = vmatprep.subr.mxu0 0.0
        %368 = vmatpush1.msra.mxu0 0.0
        %369 = vmatprep.subr.mxu0 0.0
        %370 = vmatpush1.msra.mxu0 0.0
        %371 = vmatprep.subr.mxu0 0.0
        %372 = vmatpush1.msra.mxu0 0.0
        %373 = vmatprep.subr.mxu0 0.0
        %374 = vmatpush1.msra.mxu0 0.0
        %375 = vmatprep.subr.mxu0 0.0
        %376 = vmatpush1.msra.mxu0 0.0
        %377 = vmatprep.subr.mxu0 0.0
        %378 = vmatpush1.msra.mxu0 %v323
        %379 = vmatprep.subr.mxu0 0.0
        %380 = vmatpush1.msra.mxu0 %v322
        %381 = vmatprep.subr.mxu0 0.0
        %382 = vmatpush1.msra.mxu0 %v321
        %383 = vmatprep.subr.mxu0 0.0
        %384 = vmatpush1.msra.mxu0 %v320
        %385 = vmatprep.subr.mxu0 0.0
        %386 = vmatpush1.msra.mxu0 %v319
        %387 = vmatprep.subr.mxu0 0.0
        %388 = vmatpush1.msra.mxu0 %v318
        %389 = vmatprep.subr.mxu0 0.0
        %390 = vmatpush1.msra.mxu0 %v317
        %391 = vmatprep.subr.mxu0 0.0
        %392 = vmatpush1.msra.mxu0 %v316
        %393 = vmatprep.subr.mxu0 0.0
        %394 = vmatpush2.msra.mxu0 0.0
        %395 = vmatprep.subr.mxu0 0.0
        %396 = vmatpush2.msra.mxu0 0.0
        %397 = vmatprep.subr.mxu0 0.0
        %398 = vmatpush2.msra.mxu0 0.0
        %399 = vmatprep.subr.mxu0 0.0
        %400 = vmatpush2.msra.mxu0 0.0
        %401 = vmatprep.subr.mxu0 0.0
        %402 = vmatpush2.msra.mxu0 0.0
        %403 = vmatprep.subr.mxu0 0.0
        %404 = vmatpush2.msra.mxu0 0.0
        %405 = vmatprep.subr.mxu0 0.0
        %406 = vmatpush2.msra.mxu0 0.0
        %407 = vmatprep.subr.mxu0 0.0
        %408 = vmatpush2.msra.mxu0 0.0
        %409 = vmatprep.subr.mxu0 0.0
        %410 = vmatpush2.msra.mxu0 0.0
        %411 = vmatprep.subr.mxu0 0.0
        %412 = vmatpush2.msra.mxu0 0.0
        %413 = vmatprep.subr.mxu0 0.0
        %414 = vmatpush2.msra.mxu0 0.0
        %415 = vmatprep.subr.mxu0 0.0
        %416 = vmatpush2.msra.mxu0 0.0
        %417 = vmatprep.subr.mxu0 0.0
        %418 = vmatpush2.msra.mxu0 0.0
        %419 = vmatprep.subr.mxu0 0.0
        %420 = vmatpush2.msra.mxu0 0.0
        %421 = vmatprep.subr.mxu0 0.0
        %422 = vmatpush2.msra.mxu0 0.0
        %423 = vmatprep.subr.mxu0 0.0
        %424 = vmatpush2.msra.mxu0 0.0
        %425 = vmatprep.mubr.f32.mxu0 0.0
        %426 = vmatmul.mubr.f32.gmra.mxu0 %v359
        %v427 = vpop.f32.mrf.mxu0
        %v428 = vadd.f32 0.0, %v427
        %v429 = vpop.f32.mrf.mxu0
        %430 = vdwg.mxu0
        %v431 = vmax.f32 %v428, 0.0
        %vm432 = vcmask 64512
        %v434 = vsel %vm432, %v325, 0
        %v437 = vsel %vm432, %v326, 0
        %v440 = vsel %vm432, %v327, 0
        %v443 = vsel %vm432, %v328, 0
        %v446 = vsel %vm432, %v329, 0
        %v449 = vsel %vm432, %v330, 0
        %v452 = vsel %vm432, %v331, 0
        %v455 = vsel %vm432, %v332, 0
        %v458 = vsel %vm432, %v333, 0
        %v461 = vsel %vm432, %v334, 0
        %v464 = vsel %vm432, %v335, 0
        %v467 = vsel %vm432, %v336, 0
        %v470 = vsel %vm432, %v337, 0
        %v473 = vsel %vm432, %v338, 0
        %v476 = vsel %vm432, %v339, 0
        %v479 = vsel %vm432, %v340, 0
        %481 = vmatprep.subr.mxu0 0.0
        %482 = vmatpush1.msra.mxu0 0.0
        %483 = vmatprep.subr.mxu0 0.0
        %484 = vmatpush1.msra.mxu0 0.0
        %485 = vmatprep.subr.mxu0 0.0
        %486 = vmatpush1.msra.mxu0 0.0
        %487 = vmatprep.subr.mxu0 0.0
        %488 = vmatpush1.msra.mxu0 0.0
        %489 = vmatprep.subr.mxu0 0.0
        %490 = vmatpush1.msra.mxu0 0.0
        %491 = vmatprep.subr.mxu0 0.0
        %492 = vmatpush1.msra.mxu0 0.0
        %493 = vmatprep.subr.mxu0 0.0
        %494 = vmatpush1.msra.mxu0 0.0
        %495 = vmatprep.subr.mxu0 0.0
        %496 = vmatpush1.msra.mxu0 0.0
        %497 = vmatprep.subr.mxu0 0.0
        %498 = vmatpush1.msra.mxu0 0.0
        %499 = vmatprep.subr.mxu0 0.0
        %500 = vmatpush1.msra.mxu0 0.0
        %501 = vmatprep.subr.mxu0 0.0
        %502 = vmatpush1.msra.mxu0 0.0
        %503 = vmatprep.subr.mxu0 0.0
        %504 = vmatpush1.msra.mxu0 0.0
        %505 = vmatprep.subr.mxu0 0.0
        %506 = vmatpush1.msra.mxu0 0.0
        %507 = vmatprep.subr.mxu0 0.0
        %508 = vmatpush1.msra.mxu0 0.0
        %509 = vmatprep.subr.mxu0 0.0
        %510 = vmatpush1.msra.mxu0 0.0
        %511 = vmatprep.subr.mxu0 0.0
        %512 = vmatpush1.msra.mxu0 %v431
        %513 = vmatprep.subr.mxu0 0.0
        %514 = vmatpush2.msra.mxu0 0.0
        %515 = vmatprep.subr.mxu0 0.0
        %516 = vmatpush2.msra.mxu0 0.0
        %517 = vmatprep.subr.mxu0 0.0
        %518 = vmatpush2.msra.mxu0 0.0
        %519 = vmatprep.subr.mxu0 0.0
        %520 = vmatpush2.msra.mxu0 0.0
        %521 = vmatprep.subr.mxu0 0.0
        %522 = vmatpush2.msra.mxu0 0.0
        %523 = vmatprep.subr.mxu0 0.0
        %524 = vmatpush2.msra.mxu0 0.0
        %525 = vmatprep.subr.mxu0 0.0
        %526 = vmatpush2.msra.mxu0 0.0
        %527 = vmatprep.subr.mxu0 0.0
        %528 = vmatpush2.msra.mxu0 0.0
        %529 = vmatprep.subr.mxu0 0.0
        %530 = vmatpush2.msra.mxu0 0.0
        %531 = vmatprep.subr.mxu0 0.0
        %532 = vmatpush2.msra.mxu0 0.0
        %533 = vmatprep.subr.mxu0 0.0
        %534 = vmatpush2.msra.mxu0 0.0
        %535 = vmatprep.subr.mxu0 0.0
        %536 = vmatpush2.msra.mxu0 0.0
        %537 = vmatprep.subr.mxu0 0.0
        %538 = vmatpush2.msra.mxu0 0.0
        %539 = vmatprep.subr.mxu0 0.0
        %540 = vmatpush2.msra.mxu0 0.0
        %541 = vmatprep.subr.mxu0 0.0
        %542 = vmatpush2.msra.mxu0 0.0
        %543 = vmatprep.subr.mxu0 0.0
        %544 = vmatpush2.msra.mxu0 0.0
        %545 = vmatprep.mubr.f32.mxu0 0.0
        %546 = vmatmul.mubr.f32.gmra.mxu0 %v434
        %v547 = vpop.f32.mrf.mxu0
        %v548 = vadd.f32 0.0, %v547
        %v549 = vpop.f32.mrf.mxu0
        %550 = vmatprep.mubr.f32.mxu0 0.0
        %551 = vmatmul.mubr.f32.gmra.mxu0 %v437
        %v552 = vpop.f32.mrf.mxu0
        %v553 = vadd.f32 0.0, %v552
        %v554 = vpop.f32.mrf.mxu0
        %555 = vmatprep.mubr.f32.mxu0 0.0
        %556 = vmatmul.mubr.f32.gmra.mxu0 %v440
        %v557 = vpop.f32.mrf.mxu0
        %v558 = vadd.f32 0.0, %v557
        %v559 = vpop.f32.mrf.mxu0
        %560 = vmatprep.mubr.f32.mxu0 0.0
        %561 = vmatmul.mubr.f32.gmra.mxu0 %v443
        %v562 = vpop.f32.mrf.mxu0
        %v563 = vadd.f32 0.0, %v562
        %v564 = vpop.f32.mrf.mxu0
        %565 = vmatprep.mubr.f32.mxu0 0.0
        %566 = vmatmul.mubr.f32.gmra.mxu0 %v446
        %v567 = vpop.f32.mrf.mxu0
        %v568 = vadd.f32 0.0, %v567
        %v569 = vpop.f32.mrf.mxu0
        %570 = vmatprep.mubr.f32.mxu0 0.0
        %571 = vmatmul.mubr.f32.gmra.mxu0 %v449
        %v572 = vpop.f32.mrf.mxu0
        %v573 = vadd.f32 0.0, %v572
        %v574 = vpop.f32.mrf.mxu0
        %575 = vmatprep.mubr.f32.mxu0 0.0
        %576 = vmatmul.mubr.f32.gmra.mxu0 %v452
        %v577 = vpop.f32.mrf.mxu0
        %v578 = vadd.f32 0.0, %v577
        %v579 = vpop.f32.mrf.mxu0
        %580 = vmatprep.mubr.f32.mxu0 0.0
        %581 = vmatmul.mubr.f32.gmra.mxu0 %v455
        %v582 = vpop.f32.mrf.mxu0
        %v583 = vadd.f32 0.0, %v582
        %v584 = vpop.f32.mrf.mxu0
        %585 = vmatprep.mubr.f32.mxu0 0.0
        %586 = vmatmul.mubr.f32.gmra.mxu0 %v458
        %v587 = vpop.f32.mrf.mxu0
        %v588 = vadd.f32 0.0, %v587
        %v589 = vpop.f32.mrf.mxu0
        %590 = vmatprep.mubr.f32.mxu0 0.0
        %591 = vmatmul.mubr.f32.gmra.mxu0 %v461
        %v592 = vpop.f32.mrf.mxu0
        %v593 = vadd.f32 0.0, %v592
        %v594 = vpop.f32.mrf.mxu0
        %595 = vmatprep.mubr.f32.mxu0 0.0
        %596 = vmatmul.mubr.f32.gmra.mxu0 %v464
        %v597 = vpop.f32.mrf.mxu0
        %v598 = vadd.f32 0.0, %v597
        %v599 = vpop.f32.mrf.mxu0
        %600 = vmatprep.mubr.f32.mxu0 0.0
        %601 = vmatmul.mubr.f32.gmra.mxu0 %v467
        %v602 = vpop.f32.mrf.mxu0
        %v603 = vadd.f32 0.0, %v602
        %v604 = vpop.f32.mrf.mxu0
        %605 = vmatprep.mubr.f32.mxu0 0.0
        %606 = vmatmul.mubr.f32.gmra.mxu0 %v470
        %v607 = vpop.f32.mrf.mxu0
        %v608 = vadd.f32 0.0, %v607
        %v609 = vpop.f32.mrf.mxu0
        %610 = vmatprep.mubr.f32.mxu0 0.0
        %611 = vmatmul.mubr.f32.gmra.mxu0 %v473
        %v612 = vpop.f32.mrf.mxu0
        %v613 = vadd.f32 0.0, %v612
        %v614 = vpop.f32.mrf.mxu0
        %615 = vmatprep.mubr.f32.mxu0 0.0
        %616 = vmatmul.mubr.f32.gmra.mxu0 %v476
        %v617 = vpop.f32.mrf.mxu0
        %v618 = vadd.f32 0.0, %v617
        %v619 = vpop.f32.mrf.mxu0
        %620 = vmatprep.mubr.f32.mxu0 0.0
        %621 = vmatmul.mubr.f32.gmra.mxu0 %v479
        %v622 = vpop.f32.mrf.mxu0
        %v623 = vadd.f32 0.0, %v622
        %v624 = vpop.f32.mrf.mxu0
        %625 = vdwg.mxu0
        %642 = vrot.lane.b32.xlu0 %v548, 127
        %v643 = vpop.permute.xlu0 %642
        %644 = vrot.lane.b32.xlu0 %v553, 127
        %v645 = vpop.permute.xlu0 %644
        %646 = vrot.lane.b32.xlu0 %v558, 127
        %v647 = vpop.permute.xlu0 %646
        %648 = vrot.lane.b32.xlu0 %v563, 127
        %v649 = vpop.permute.xlu0 %648
        %650 = vrot.lane.b32.xlu0 %v568, 127
        %v651 = vpop.permute.xlu0 %650
        %652 = vrot.lane.b32.xlu0 %v573, 127
        %v653 = vpop.permute.xlu0 %652
        %654 = vrot.lane.b32.xlu0 %v578, 127
        %v655 = vpop.permute.xlu0 %654
        %656 = vrot.lane.b32.xlu0 %v583, 127
        %v657 = vpop.permute.xlu0 %656
        %658 = vrot.lane.b32.xlu0 %v588, 127
        %v659 = vpop.permute.xlu0 %658
        %660 = vrot.lane.b32.xlu0 %v593, 127
        %v661 = vpop.permute.xlu0 %660
        %662 = vrot.lane.b32.xlu0 %v598, 127
        %v663 = vpop.permute.xlu0 %662
        %664 = vrot.lane.b32.xlu0 %v603, 127
        %v665 = vpop.permute.xlu0 %664
        %666 = vrot.lane.b32.xlu0 %v608, 127
        %v667 = vpop.permute.xlu0 %666
        %668 = vrot.lane.b32.xlu0 %v613, 127
        %v669 = vpop.permute.xlu0 %668
        %670 = vrot.lane.b32.xlu0 %v618, 127
        %v671 = vpop.permute.xlu0 %670
        %672 = vrot.lane.b32.xlu0 %v623, 127
        %v673 = vpop.permute.xlu0 %672
        %v690 = vadd.f32 %v548, %v643
        %v691 = vadd.f32 %v553, %v645
        %v692 = vadd.f32 %v558, %v647
        %v693 = vadd.f32 %v563, %v649
        %v694 = vadd.f32 %v568, %v651
        %v695 = vadd.f32 %v573, %v653
        %v696 = vadd.f32 %v578, %v655
        %v697 = vadd.f32 %v583, %v657
        %v698 = vadd.f32 %v588, %v659
        %v699 = vadd.f32 %v593, %v661
        %v700 = vadd.f32 %v598, %v663
        %v701 = vadd.f32 %v603, %v665
        %v702 = vadd.f32 %v608, %v667
        %v703 = vadd.f32 %v613, %v669
        %v704 = vadd.f32 %v618, %v671
        %v705 = vadd.f32 %v623, %v673
        %v706 = vxor.u32 %v690, 2147483648
        %v707 = vxor.u32 %v691, 2147483648
        %v708 = vxor.u32 %v692, 2147483648
        %v709 = vxor.u32 %v693, 2147483648
        %v710 = vxor.u32 %v694, 2147483648
        %v711 = vxor.u32 %v695, 2147483648
        %v712 = vxor.u32 %v696, 2147483648
        %v713 = vxor.u32 %v697, 2147483648
        %v714 = vxor.u32 %v698, 2147483648
        %v715 = vxor.u32 %v699, 2147483648
        %v716 = vxor.u32 %v700, 2147483648
        %v717 = vxor.u32 %v701, 2147483648
        %v718 = vxor.u32 %v702, 2147483648
        %v719 = vxor.u32 %v703, 2147483648
        %v720 = vxor.u32 %v704, 2147483648
        %v721 = vxor.u32 %v705, 2147483648
        %v722 = vmul.f32 %v706, 1.442695
        %v723 = vpow.pop %v722
        %v724 = vmul.f32 %v707, 1.442695
        %v725 = vpow.pop %v724
        %v726 = vmul.f32 %v708, 1.442695
        %v727 = vpow.pop %v726
        %v728 = vmul.f32 %v709, 1.442695
        %v729 = vpow.pop %v728
        %v730 = vmul.f32 %v710, 1.442695
        %v731 = vpow.pop %v730
        %v732 = vmul.f32 %v711, 1.442695
        %v733 = vpow.pop %v732
        %v734 = vmul.f32 %v712, 1.442695
        %v735 = vpow.pop %v734
        %v736 = vmul.f32 %v713, 1.442695
        %v737 = vpow.pop %v736
        %v738 = vmul.f32 %v714, 1.442695
        %v739 = vpow.pop %v738
        %v740 = vmul.f32 %v715, 1.442695
        %v741 = vpow.pop %v740
        %v742 = vmul.f32 %v716, 1.442695
        %v743 = vpow.pop %v742
        %v744 = vmul.f32 %v717, 1.442695
        %v745 = vpow.pop %v744
        %v746 = vmul.f32 %v718, 1.442695
        %v747 = vpow.pop %v746
        %v748 = vmul.f32 %v719, 1.442695
        %v749 = vpow.pop %v748
        %v750 = vmul.f32 %v720, 1.442695
        %v751 = vpow.pop %v750
        %v752 = vmul.f32 %v721, 1.442695
        %v753 = vpow.pop %v752
        %v754 = vadd.f32 %v723, 1.0
        %v755 = vadd.f32 %v725, 1.0
        %v756 = vadd.f32 %v727, 1.0
        %v757 = vadd.f32 %v729, 1.0
        %v758 = vadd.f32 %v731, 1.0
        %v759 = vadd.f32 %v733, 1.0
        %v760 = vadd.f32 %v735, 1.0
        %v761 = vadd.f32 %v737, 1.0
        %v762 = vadd.f32 %v739, 1.0
        %v763 = vadd.f32 %v741, 1.0
        %v764 = vadd.f32 %v743, 1.0
        %v765 = vadd.f32 %v745, 1.0
        %v766 = vadd.f32 %v747, 1.0
        %v767 = vadd.f32 %v749, 1.0
        %v768 = vadd.f32 %v751, 1.0
        %v769 = vadd.f32 %v753, 1.0
        %v770 = vrcp.pop %v754
        %v771 = vmul.f32 1.0, %v770
        %v772 = vrcp.pop %v755
        %v773 = vmul.f32 1.0, %v772
        %v774 = vrcp.pop %v756
        %v775 = vmul.f32 1.0, %v774
        %v776 = vrcp.pop %v757
        %v777 = vmul.f32 1.0, %v776
        %v778 = vrcp.pop %v758
        %v779 = vmul.f32 1.0, %v778
        %v780 = vrcp.pop %v759
        %v781 = vmul.f32 1.0, %v780
        %v782 = vrcp.pop %v760
        %v783 = vmul.f32 1.0, %v782
        %v784 = vrcp.pop %v761
        %v785 = vmul.f32 1.0, %v784
        %v786 = vrcp.pop %v762
        %v787 = vmul.f32 1.0, %v786
        %v788 = vrcp.pop %v763
        %v789 = vmul.f32 1.0, %v788
        %v790 = vrcp.pop %v764
        %v791 = vmul.f32 1.0, %v790
        %v792 = vrcp.pop %v765
        %v793 = vmul.f32 1.0, %v792
        %v794 = vrcp.pop %v766
        %v795 = vmul.f32 1.0, %v794
        %v796 = vrcp.pop %v767
        %v797 = vmul.f32 1.0, %v796
        %v798 = vrcp.pop %v768
        %v799 = vmul.f32 1.0, %v798
        %v800 = vrcp.pop %v769
        %v801 = vmul.f32 1.0, %v800
        %802 = vmatprep.subr.mxu0 0.0
        %803 = vmatpush1.msra.mxu0 %v801
        %804 = vmatprep.subr.mxu0 0.0
        %805 = vmatpush1.msra.mxu0 %v799
        %806 = vmatprep.subr.mxu0 0.0
        %807 = vmatpush1.msra.mxu0 %v797
        %808 = vmatprep.subr.mxu0 0.0
        %809 = vmatpush1.msra.mxu0 %v795
        %810 = vmatprep.subr.mxu0 0.0
        %811 = vmatpush1.msra.mxu0 %v793
        %812 = vmatprep.subr.mxu0 0.0
        %813 = vmatpush1.msra.mxu0 %v791
        %814 = vmatprep.subr.mxu0 0.0
        %815 = vmatpush1.msra.mxu0 %v789
        %816 = vmatprep.subr.mxu0 0.0
        %817 = vmatpush1.msra.mxu0 %v787
        %818 = vmatprep.subr.mxu0 0.0
        %819 = vmatpush1.msra.mxu0 %v785
        %820 = vmatprep.subr.mxu0 0.0
        %821 = vmatpush1.msra.mxu0 %v783
        %822 = vmatprep.subr.mxu0 0.0
        %823 = vmatpush1.msra.mxu0 %v781
        %824 = vmatprep.subr.mxu0 0.0
        %825 = vmatpush1.msra.mxu0 %v779
        %826 = vmatprep.subr.mxu0 0.0
        %827 = vmatpush1.msra.mxu0 %v777
        %828 = vmatprep.subr.mxu0 0.0
        %829 = vmatpush1.msra.mxu0 %v775
        %830 = vmatprep.subr.mxu0 0.0
        %831 = vmatpush1.msra.mxu0 %v773
        %832 = vmatprep.subr.mxu0 0.0
        %833 = vmatpush1.msra.mxu0 %v771
        %834 = vmatprep.subr.mxu0 0.0
        %835 = vmatpush2.msra.mxu0 0.0
        %836 = vmatprep.subr.mxu0 0.0
        %837 = vmatpush2.msra.mxu0 0.0
        %838 = vmatprep.subr.mxu0 0.0
        %839 = vmatpush2.msra.mxu0 0.0
        %840 = vmatprep.subr.mxu0 0.0
        %841 = vmatpush2.msra.mxu0 0.0
        %842 = vmatprep.subr.mxu0 0.0
        %843 = vmatpush2.msra.mxu0 0.0
        %844 = vmatprep.subr.mxu0 0.0
        %845 = vmatpush2.msra.mxu0 0.0
        %846 = vmatprep.subr.mxu0 0.0
        %847 = vmatpush2.msra.mxu0 0.0
        %848 = vmatprep.subr.mxu0 0.0
        %849 = vmatpush2.msra.mxu0 0.0
        %850 = vmatprep.subr.mxu0 0.0
        %851 = vmatpush2.msra.mxu0 0.0
        %852 = vmatprep.subr.mxu0 0.0
        %853 = vmatpush2.msra.mxu0 0.0
        %854 = vmatprep.subr.mxu0 0.0
        %855 = vmatpush2.msra.mxu0 0.0
        %856 = vmatprep.subr.mxu0 0.0
        %857 = vmatpush2.msra.mxu0 0.0
        %858 = vmatprep.subr.mxu0 0.0
        %859 = vmatpush2.msra.mxu0 0.0
        %860 = vmatprep.subr.mxu0 0.0
        %861 = vmatpush2.msra.mxu0 0.0
        %862 = vmatprep.subr.mxu0 0.0
        %863 = vmatpush2.msra.mxu0 0.0
        %864 = vmatprep.subr.mxu0 0.0
        %865 = vmatpush2.msra.mxu0 0.0
        %866 = vmatprep.mubr.f32.mxu0 0.0
        %867 = vmatmul.mubr.f32.gmra.mxu0 %v341
        %v868 = vpop.f32.mrf.mxu0
        %v869 = vadd.f32 %v349, %v868
        %v870 = vpop.f32.mrf.mxu0
        %871 = vmatprep.mubr.f32.mxu0 0.0
        %872 = vmatmul.mubr.f32.gmra.mxu0 %v342
        %v873 = vpop.f32.mrf.mxu0
        %v874 = vadd.f32 %v350, %v873
        %v875 = vpop.f32.mrf.mxu0
        %876 = vmatprep.mubr.f32.mxu0 0.0
        %877 = vmatmul.mubr.f32.gmra.mxu0 %v343
        %v878 = vpop.f32.mrf.mxu0
        %v879 = vadd.f32 %v351, %v878
        %v880 = vpop.f32.mrf.mxu0
        %881 = vmatprep.mubr.f32.mxu0 0.0
        %882 = vmatmul.mubr.f32.gmra.mxu0 %v344
        %v883 = vpop.f32.mrf.mxu0
        %v884 = vadd.f32 %v352, %v883
        %v885 = vpop.f32.mrf.mxu0
        %886 = vmatprep.mubr.f32.mxu0 0.0
        %887 = vmatmul.mubr.f32.gmra.mxu0 %v345
        %v888 = vpop.f32.mrf.mxu0
        %v889 = vadd.f32 %v353, %v888
        %v890 = vpop.f32.mrf.mxu0
        %891 = vmatprep.mubr.f32.mxu0 0.0
        %892 = vmatmul.mubr.f32.gmra.mxu0 %v346
        %v893 = vpop.f32.mrf.mxu0
        %v894 = vadd.f32 %v354, %v893
        %v895 = vpop.f32.mrf.mxu0
        %896 = vmatprep.mubr.f32.mxu0 0.0
        %897 = vmatmul.mubr.f32.gmra.mxu0 %v347
        %v898 = vpop.f32.mrf.mxu0
        %v899 = vadd.f32 %v355, %v898
        %v900 = vpop.f32.mrf.mxu0
        %901 = vmatprep.mubr.f32.mxu0 0.0
        %902 = vmatmul.mubr.f32.gmra.mxu0 %v348
        %v903 = vpop.f32.mrf.mxu0
        %v904 = vadd.f32 %v356, %v903
        %v905 = vpop.f32.mrf.mxu0
        %906 = vdwg.mxu0
        %908 = vset.pattern.permute.xlu0 0
        %909 = vperm.xlu0 %908, %v869
        %v910 = vpop.permute.xlu0 %909
        %913 = vset.pattern.permute.xlu0 0
        %914 = vperm.xlu0 %913, %v874
        %v915 = vpop.permute.xlu0 %914
        %918 = vset.pattern.permute.xlu0 0
        %919 = vperm.xlu0 %918, %v879
        %v920 = vpop.permute.xlu0 %919
        %923 = vset.pattern.permute.xlu0 0
        %924 = vperm.xlu0 %923, %v884
        %v925 = vpop.permute.xlu0 %924
        %928 = vset.pattern.permute.xlu0 0
        %929 = vperm.xlu0 %928, %v889
        %v930 = vpop.permute.xlu0 %929
        %933 = vset.pattern.permute.xlu0 0
        %934 = vperm.xlu0 %933, %v894
        %v935 = vpop.permute.xlu0 %934
        %938 = vset.pattern.permute.xlu0 0
        %939 = vperm.xlu0 %938, %v899
        %v940 = vpop.permute.xlu0 %939
        %943 = vset.pattern.permute.xlu0 0
        %944 = vperm.xlu0 %943, %v904
        %v945 = vpop.permute.xlu0 %944
        %v947 = vmul.f32 %v243, %v910
        %v948 = vmul.f32 %v244, %v910
        %v949 = vmul.f32 %v245, %v915
        %v950 = vmul.f32 %v246, %v915
        %v951 = vmul.f32 %v247, %v920
        %v952 = vmul.f32 %v248, %v920
        %v953 = vmul.f32 %v249, %v925
        %v954 = vmul.f32 %v250, %v925
        %v955 = vmul.f32 %v251, %v930
        %v956 = vmul.f32 %v252, %v930
        %v957 = vmul.f32 %v253, %v935
        %v958 = vmul.f32 %v254, %v935
        %v959 = vmul.f32 %v255, %v940
        %v960 = vmul.f32 %v256, %v940
        %v961 = vmul.f32 %v257, %v945
        %v962 = vmul.f32 %v258, %v945
        %963 = vst [vmem:[%s242] sm:$0xff] %v947
        %964 = vst [vmem:[%s242 + $0x8] sm:$0xff] %v948
        %965 = vst [vmem:[%s242 + $0x10] sm:$0xff] %v949
        %966 = vst [vmem:[%s242 + $0x18] sm:$0xff] %v950
        %967 = vst [vmem:[%s242 + $0x20] sm:$0xff] %v951
        %968 = vst [vmem:[%s242 + $0x28] sm:$0xff] %v952
        %969 = vst [vmem:[%s242 + $0x30] sm:$0xff] %v953
        %970 = vst [vmem:[%s242 + $0x38] sm:$0xff] %v954
        %971 = vst [vmem:[%s242 + $0x40] sm:$0xff] %v955
        %972 = vst [vmem:[%s242 + $0x48] sm:$0xff] %v956
        %973 = vst [vmem:[%s242 + $0x50] sm:$0xff] %v957
        %974 = vst [vmem:[%s242 + $0x58] sm:$0xff] %v958
        %975 = vst [vmem:[%s242 + $0x60] sm:$0xff] %v959
        %976 = vst [vmem:[%s242 + $0x68] sm:$0xff] %v960
        %977 = vst [vmem:[%s242 + $0x70] sm:$0xff] %v961
        %978 = vst [vmem:[%s242 + $0x78] sm:$0xff] %v962
        %s979 = sand.u32 %s140, 1
        %s980 = scalar_lea.sflag [#allocation4], %s979
        %s981 = sand.u32 %s140, 1
        %s982 = smul.addr %s981, 128
        %s983 = scalar_lea.vmem [#allocation5], %s982
        // Predicated region
        $region45: #{tpu_custom_call.1} parent=39 // pred_check
          %p984 = pneg %p150
        $region46: #{tpu_custom_call.1} parent=39 // pred_check_branch
          %986 = sbr.rel (%p984) target = $region48
        $region47: #{tpu_custom_call.1} parent=39 // pred_region
          %s988 = ssub.s32 2048, 2048
          %989 = vsyncadd %s980, %s988
          %s990 = smul.addr %s22, 16
          %s991 = smul.addr %s990, 128
          %s992 = scalar_lea.hbm %s5, %s991
          %s993 = sshll.u32 %s983, 4
          %s994 = int_to_ptr.vmem [resolvable:$true] %s993
          %999 = dma.vmem_to_hbm [thread:$0]  %s994, 2048, %s992, %s980, 256, 256, 16
        $region48: #{tpu_custom_call.1} parent=39 // pred_fallthru
          _
      $region40: #{tpu_custom_call.1} parent=5 // pred_fallthru
        _
      %p1000 = scmp.le.s32.totalorder 2, %s17
      // Predicated region
      $region49: #{tpu_custom_call.1} parent=5 // pred_check
        %p1001 = pneg %p1000
      $region50: #{tpu_custom_call.1} parent=5 // pred_check_branch
        %1003 = sbr.rel (%p1001) target = $region52
      $region51: #{tpu_custom_call.1} parent=5 // pred_region
        %s1004 = ssub.s32 %s17, 2
        // Predicated region
        $region53: #{tpu_custom_call.1} parent=51 // pred_check
          %p1005 = pneg %p156
        $region54: #{tpu_custom_call.1} parent=51 // pred_check_branch
          %1007 = sbr.rel (%p1005) target = $region56
        $region55: #{tpu_custom_call.1} parent=51 // pred_region
          %s1008 = sand.u32 %s141, 1
          %s1009 = scalar_lea.sflag [#allocation4], %s1008
          %s1010 = sand.u32 %s141, 1
          %s1011 = smul.addr %s1010, 128
          %s1012 = scalar_lea.vmem [#allocation5], %s1011
          %1013 = dma.done %s1009, 2048
        $region56: #{tpu_custom_call.1} parent=51 // pred_fallthru
          _
      $region52: #{tpu_custom_call.1} parent=5 // pred_fallthru
        _
    $region6: #{tpu_custom_call.1} parent=1 // loop_footer
      %s21 = sadd.s32 1, %s17
    $region7: #{tpu_custom_call.1} parent=1 // loop_footer_branch
      %16 = sbr.rel target = $region3
    $region8: #{tpu_custom_call.1} parent=1 // loop_exit
      _
    %1014 = vsyncpa [#allocation3], 1
    %s1015 = scalar_lea.sflag [#allocation3], 1
    %1016 = vsyncpa %s1015, 1
    %1017 = vsyncpa [#allocation4], 1
    %s1018 = scalar_lea.sflag [#allocation4], 1
    %1019 = vsyncpa %s1018, 1

</llo_original>
